<compile_context>
chip_gen: v5e
topology: v5e:2x2
jax: 0.10.0
libtpu: 0.0.40
codegen_flags: <defaults>
</compile_context>

<pallas_src>
import functools

import jax
import jax.numpy as jnp
from jax.experimental import pallas as pl
from jax.experimental.pallas import tpu as pltpu

NEG_SLOPE = 0.1
BN_EPS = 1e-5


def _resblock_kernel(x_ref, xtop_ref, xbot_ref, w1_ref, b1_ref, w2_ref, b2_ref,
                     o_ref, *, TH, W, Cmid):
    """One (image, row-band) tile: out = lrelu(bn2(conv2(lrelu(bn1(conv1(x)))))) + x."""
    i = pl.program_id(1)
    n_tiles = pl.num_programs(1)
    L = TH * W

    x = x_ref[0]                              # (C, TH*W) f32
    w1 = w1_ref[...]                          # (Cmid, C) bf16 (bn1 scale folded in)
    b1 = b1_ref[...]                          # (Cmid, 1) f32

    def conv1(xin):
        # 1x1 conv == channel matmul (bf16 MXU, f32 accumulate) + bn1 shift + LeakyReLU.
        y = jnp.dot(w1, xin.astype(jnp.bfloat16),
                    preferred_element_type=jnp.float32) + b1
        return jnp.where(y >= 0, y, NEG_SLOPE * y)

    y_cur = conv1(x)                          # (Cmid, TH*W)
    # conv1 of the single image row above / below this row band.  At the image
    # border the 3x3 "SAME" padding is zero in y-space, so zero the halos there.
    y_top = conv1(xtop_ref[0, 0]) * jnp.where(i == 0, 0.0, 1.0)            # (Cmid, W)
    y_bot = conv1(xbot_ref[0, 0]) * jnp.where(i == n_tiles - 1, 0.0, 1.0)  # (Cmid, W)

    # Row-shifted views of y (dy = -1, 0, +1), all (Cmid, TH*W); rows come from
    # the band itself except the first/last, which come from the halo rows.
    y_m1 = jnp.concatenate([y_top, y_cur[:, :L - W]], axis=1)
    y_p1 = jnp.concatenate([y_cur[:, W:], y_bot], axis=1)
    ystack = jnp.concatenate([y_m1, y_cur, y_p1], axis=0)                  # (3*Cmid, L)

    # Column shifts (dx = -1 / +1): a one-lane shift plus a mask zeroing output
    # positions whose source column w+dx falls outside [0, W) (horizontal pad).
    col = jax.lax.broadcasted_iota(jnp.int32, (1, L), 1) % W
    left_ok = (col != 0).astype(jnp.float32)       # source column w-1 is valid
    right_ok = (col != W - 1).astype(jnp.float32)  # source column w+1 is valid
    zcol = jnp.zeros((3 * Cmid, 1), jnp.float32)
    x_m = jnp.concatenate([zcol, ystack[:, :L - 1]], axis=1) * left_ok     # y(h+dy, w-1)
    x_p = jnp.concatenate([ystack[:, 1:], zcol], axis=1) * right_ok        # y(h+dy, w+1)

    # Fused 3x3 conv: ONE big-K matmul over the im2col stack
    # (row order: dx in {-1,0,+1} outer, dy in {-1,0,+1} inner, channel innermost).
    im2col = jnp.concatenate([x_m, ystack, x_p], axis=0).astype(jnp.bfloat16)
    z = jnp.dot(w2_ref[...], im2col, preferred_element_type=jnp.float32) + b2_ref[...]
    z = jnp.where(z >= 0, z, NEG_SLOPE * z)   # bn2 shift (scale folded) + LeakyReLU

    o_ref[0] = (z + x).astype(o_ref.dtype)    # residual add in f32


def _pick_tile_rows(H, W):
    """Pick the row-band height TH: a divisor of H whose flattened width TH*W is
    a multiple of 128 lanes (BlockSpec requirement), preferring bands of at
    least 512 lanes; falls back to the whole image (full-extent block)."""
    valid = [th for th in range(1, H) if H % th == 0 and (th * W) % 128 == 0]
    if not valid:
        return H
    big = [th for th in valid if th * W >= 512]
    return min(big) if big else min(valid)


def prepare_resblock_params(w1_oihw, g1, be1, m1, v1, w2_oihw, g2, be2, m2, v2):
    """Fold eval-mode BatchNorm into the conv weights / shifts and lay the
    weights out for the kernel (bf16 weights for the MXU, f32 shifts)."""
    s1 = g1 / jnp.sqrt(v1 + BN_EPS)
    s2 = g2 / jnp.sqrt(v2 + BN_EPS)
    b1 = (be1 - m1 * s1)[:, None].astype(jnp.float32)                 # (Cmid, 1)
    b2 = (be2 - m2 * s2)[:, None].astype(jnp.float32)                 # (C, 1)
    # 1x1 conv: (Cmid, C, 1, 1) -> (Cmid, C) matmul weight, bn1 scale folded in.
    w1f = (s1[:, None] * w1_oihw[:, :, 0, 0]).astype(jnp.bfloat16)
    # 3x3 conv: (C, Cmid, ky, kx) -> (C, kx, ky, Cmid) -> (C, 9*Cmid), matching
    # the kernel's im2col row order (dx outer, dy inner, channel innermost).
    C, Cmid = w2_oihw.shape[0], w2_oihw.shape[1]
    w2f = jnp.transpose(w2_oihw, (0, 3, 2, 1)).reshape(C, 9 * Cmid)
    w2f = (s2[:, None] * w2f).astype(jnp.bfloat16)
    return w1f, b1, w2f, b2


def resblock_pallas(x_nchw, w1f, b1, w2f, b2):
    """x_nchw: (N, C, H, W) float32 -> (N, C, H, W) float32."""
    N, C, H, W = x_nchw.shape
    assert C % 2 == 0, "ResBlock requires an even channel count"
    Cmid = C // 2
    TH = _pick_tile_rows(H, W)
    T = H // TH
    HW = H * W

    x_flat = x_nchw.reshape(N, C, HW)          # pure reshape, no transpose

    # One image row above / below each row band (clamped at the border; the
    # kernel zero-masks the clamped rows).  Tiny (N*T*C*W) side inputs.
    tiles = jnp.arange(T)
    top_rows = jnp.maximum(tiles * TH - 1, 0)
    bot_rows = jnp.minimum(tiles * TH + TH, H - 1)
    x_top = jnp.transpose(x_nchw[:, :, top_rows, :], (0, 2, 1, 3))   # (N, T, C, W)
    x_bot = jnp.transpose(x_nchw[:, :, bot_rows, :], (0, 2, 1, 3))   # (N, T, C, W)

    kernel = functools.partial(_resblock_kernel, TH=TH, W=W, Cmid=Cmid)

    out_flat = pl.pallas_call(
        kernel,
        out_shape=jax.ShapeDtypeStruct((N, C, HW), jnp.float32),
        grid_spec=pltpu.PrefetchScalarGridSpec(
            num_scalar_prefetch=0,
            grid=(N, T),
            in_specs=[
                pl.BlockSpec((1, C, TH * W), lambda n, i: (n, 0, i)),    # x row band
                pl.BlockSpec((1, 1, C, W), lambda n, i: (n, i, 0, 0)),   # top halo row
                pl.BlockSpec((1, 1, C, W), lambda n, i: (n, i, 0, 0)),   # bottom halo row
                pl.BlockSpec((Cmid, C), lambda n, i: (0, 0)),            # conv1 weight (bf16)
                pl.BlockSpec((Cmid, 1), lambda n, i: (0, 0)),            # bn1 shift (f32)
                pl.BlockSpec((C, 9 * Cmid), lambda n, i: (0, 0)),        # conv2 im2col weight (bf16)
                pl.BlockSpec((C, 1), lambda n, i: (0, 0)),               # bn2 shift (f32)
            ],
            out_specs=pl.BlockSpec((1, C, TH * W), lambda n, i: (n, 0, i)),
        ),
        compiler_params=pltpu.CompilerParams(
            dimension_semantics=("parallel", "parallel"),
            vmem_limit_bytes=32 * 1024 * 1024),
    )(x_flat, x_top, x_bot, w1f, b1, w2f, b2)

    return out_flat.reshape(N, C, H, W)


# ------------------------- pure-JAX reference -------------------------------
def resblock_ref(x, w1_oihw, g1, be1, m1, v1, w2_oihw, g2, be2, m2, v2):
    def convlayer(inp, w, g, be, m, v):
        out = jax.lax.conv_general_dilated(
            inp, w, window_strides=(1, 1), padding="SAME",
            dimension_numbers=("NCHW", "OIHW", "NCHW"))
        scale = g / jnp.sqrt(v + BN_EPS)
        shift = be - m * scale
        out = out * scale[None, :, None, None] + shift[None, :, None, None]
        return jnp.where(out >= 0, out, NEG_SLOPE * out)

    y = convlayer(x, w1_oihw, g1, be1, m1, v1)
    y = convlayer(y, w2_oihw, g2, be2, m2, v2)
    return y + x


if __name__ == "__main__":
    key = jax.random.PRNGKey(0)
    N, C, H, W = 2, 4, 16, 16
    Cmid = C // 2

    ks = jax.random.split(key, 10)
    x = jax.random.normal(ks[0], (N, C, H, W), jnp.float32)

    # Conv weights in PyTorch OIHW layout (bias=False).
    w1_oihw = jax.random.normal(ks[1], (Cmid, C, 1, 1), jnp.float32) * 0.3
    w2_oihw = jax.random.normal(ks[2], (C, Cmid, 3, 3), jnp.float32) * 0.2

    # BatchNorm parameters / running stats (eval-mode semantics), deterministic.
    g1 = 1.0 + 0.1 * jax.random.normal(ks[3], (Cmid,), jnp.float32)
    be1 = 0.1 * jax.random.normal(ks[4], (Cmid,), jnp.float32)
    m1 = 0.1 * jax.random.normal(ks[5], (Cmid,), jnp.float32)
    v1 = 1.0 + 0.1 * jnp.abs(jax.random.normal(ks[6], (Cmid,), jnp.float32))
    g2 = 1.0 + 0.1 * jax.random.normal(ks[7], (C,), jnp.float32)
    be2 = 0.1 * jax.random.normal(ks[8], (C,), jnp.float32)
    m2 = 0.1 * jax.random.normal(ks[9], (C,), jnp.float32)
    v2 = 1.0 + 0.1 * jnp.abs(jax.random.normal(ks[0], (C,), jnp.float32))

    # Fold BN into the conv weights / shifts, lay out for the kernel (bf16 MXU).
    w1f, b1, w2f, b2 = prepare_resblock_params(
        w1_oihw, g1, be1, m1, v1, w2_oihw, g2, be2, m2, v2)

    out = resblock_pallas(x, w1f, b1, w2f, b2)
    out = jax.block_until_ready(out)

    ref = resblock_ref(x, w1_oihw, g1, be1, m1, v1, w2_oihw, g2, be2, m2, v2)
    ref = jax.block_until_ready(ref)

    assert out.shape == (N, C, H, W)
    # Tolerance relaxed vs a pure-f32 run: the matmuls use bf16 operands on the
    # MXU (f32 accumulation); the residual path stays exact f32.
    assert jnp.allclose(out, ref, rtol=2e-2, atol=2e-2), (
        float(jnp.max(jnp.abs(out - ref))))
    print("KERNEL_OK")
</pallas_src>

<mosaic_0001>
module attributes {stable_mosaic.version = 11 : i64} {
  func.func @_resblock_kernel(%arg0: i32, %arg1: i32, %arg2: memref<1x4x128xf32, #tpu.memory_space<vmem>>, %arg3: memref<1x1x4x16xf32, #tpu.memory_space<vmem>>, %arg4: memref<1x1x4x16xf32, #tpu.memory_space<vmem>>, %arg5: memref<2x4xbf16, #tpu.memory_space<vmem>>, %arg6: memref<2x1xf32, #tpu.memory_space<vmem>>, %arg7: memref<4x18xbf16, #tpu.memory_space<vmem>>, %arg8: memref<4x1xf32, #tpu.memory_space<vmem>>, %arg9: memref<1x4x128xf32, #tpu.memory_space<vmem>>) attributes {dimension_semantics = [#tpu.dimension_semantics<parallel>, #tpu.dimension_semantics<parallel>], iteration_bounds = array<i64: 2, 2>, scalar_prefetch = 0 : i64, scratch_operands = 0 : i64, tpu.core_type = #tpu.core_type<tc>, window_params = [{transform_indices = @transform_0, window_bounds = array<i64: 1, 4, 128>}, {transform_indices = @transform_1, window_bounds = array<i64: 1, 1, 4, 16>}, {transform_indices = @transform_2, window_bounds = array<i64: 1, 1, 4, 16>}, {pipeline_mode = #tpu.pipeline_mode<synchronous>, transform_indices = @transform_3, window_bounds = array<i64: 2, 4>}, {pipeline_mode = #tpu.pipeline_mode<synchronous>, transform_indices = @transform_4, window_bounds = array<i64: 2, 1>}, {pipeline_mode = #tpu.pipeline_mode<synchronous>, transform_indices = @transform_5, window_bounds = array<i64: 4, 18>}, {pipeline_mode = #tpu.pipeline_mode<synchronous>, transform_indices = @transform_6, window_bounds = array<i64: 4, 1>}, {transform_indices = @transform_7, window_bounds = array<i64: 1, 4, 128>}]} {
    %c0 = arith.constant 0 : index
    %c0_0 = arith.constant 0 : index
    %c0_1 = arith.constant 0 : index
    %0 = vector.load %arg2[%c0, %c0_0, %c0_1] : memref<1x4x128xf32, #tpu.memory_space<vmem>>, vector<1x4x128xf32>
    %1 = vector.shape_cast %0 : vector<1x4x128xf32> to vector<4x128xf32>
    %c0_2 = arith.constant 0 : index
    %c0_3 = arith.constant 0 : index
    %2 = vector.load %arg5[%c0_2, %c0_3] : memref<2x4xbf16, #tpu.memory_space<vmem>>, vector<2x4xbf16>
    %c0_4 = arith.constant 0 : index
    %c0_5 = arith.constant 0 : index
    %3 = vector.load %arg6[%c0_4, %c0_5] : memref<2x1xf32, #tpu.memory_space<vmem>>, vector<2x1xf32>
    %4 = arith.truncf %1 : vector<4x128xf32> to vector<4x128xbf16>
    %cst = arith.constant dense<0.000000e+00> : vector<2x128xf32>
    %5 = tpu.matmul %2, %4, %cst {dimension_numbers = #tpu.dot_dimension_numbers<[1], [0], [0], [1], [0, 0, 1, 1], [], []>} : vector<2x4xbf16>, vector<4x128xbf16>, vector<2x128xf32> -> vector<2x128xf32>
    %6 = vector.broadcast %3 : vector<2x1xf32> to vector<2x128xf32>
    %7 = arith.addf %5, %6 : vector<2x128xf32>
    %cst_6 = arith.constant 0.000000e+00 : f32
    %8 = vector.broadcast %cst_6 : f32 to vector<2x128xf32>
    %9 = arith.cmpf oge, %7, %8 : vector<2x128xf32>
    %cst_7 = arith.constant 1.000000e-01 : f32
    %10 = vector.broadcast %cst_7 : f32 to vector<2x128xf32>
    %11 = arith.mulf %10, %7 : vector<2x128xf32>
    %12 = arith.select %9, %7, %11 : vector<2x128xi1>, vector<2x128xf32>
    %c0_8 = arith.constant 0 : index
    %c0_9 = arith.constant 0 : index
    %c0_10 = arith.constant 0 : index
    %c0_11 = arith.constant 0 : index
    %13 = vector.load %arg3[%c0_8, %c0_9, %c0_10, %c0_11] : memref<1x1x4x16xf32, #tpu.memory_space<vmem>>, vector<1x1x4x16xf32>
    %14 = vector.shape_cast %13 : vector<1x1x4x16xf32> to vector<4x16xf32>
    %15 = arith.truncf %14 : vector<4x16xf32> to vector<4x16xbf16>
    %cst_12 = arith.constant dense<0.000000e+00> : vector<2x16xf32>
    %16 = tpu.matmul %2, %15, %cst_12 {dimension_numbers = #tpu.dot_dimension_numbers<[1], [0], [0], [1], [0, 0, 1, 1], [], []>} : vector<2x4xbf16>, vector<4x16xbf16>, vector<2x16xf32> -> vector<2x16xf32>
    %17 = vector.broadcast %3 : vector<2x1xf32> to vector<2x16xf32>
    %18 = arith.addf %16, %17 : vector<2x16xf32>
    %cst_13 = arith.constant 0.000000e+00 : f32
    %19 = vector.broadcast %cst_13 : f32 to vector<2x16xf32>
    %20 = arith.cmpf oge, %18, %19 : vector<2x16xf32>
    %cst_14 = arith.constant 1.000000e-01 : f32
    %21 = vector.broadcast %cst_14 : f32 to vector<2x16xf32>
    %22 = arith.mulf %21, %18 : vector<2x16xf32>
    %23 = arith.select %20, %18, %22 : vector<2x16xi1>, vector<2x16xf32>
    %c0_i32 = arith.constant 0 : i32
    %24 = arith.cmpi eq, %arg1, %c0_i32 : i32
    %cst_15 = arith.constant 0.000000e+00 : f32
    %cst_16 = arith.constant 1.000000e+00 : f32
    %25 = arith.select %24, %cst_15, %cst_16 : f32
    %26 = vector.broadcast %25 : f32 to vector<2x16xf32>
    %27 = arith.mulf %23, %26 : vector<2x16xf32>
    %c0_17 = arith.constant 0 : index
    %c0_18 = arith.constant 0 : index
    %c0_19 = arith.constant 0 : index
    %c0_20 = arith.constant 0 : index
    %28 = vector.load %arg4[%c0_17, %c0_18, %c0_19, %c0_20] : memref<1x1x4x16xf32, #tpu.memory_space<vmem>>, vector<1x1x4x16xf32>
    %29 = vector.shape_cast %28 : vector<1x1x4x16xf32> to vector<4x16xf32>
    %30 = arith.truncf %29 : vector<4x16xf32> to vector<4x16xbf16>
    %cst_21 = arith.constant dense<0.000000e+00> : vector<2x16xf32>
    %31 = tpu.matmul %2, %30, %cst_21 {dimension_numbers = #tpu.dot_dimension_numbers<[1], [0], [0], [1], [0, 0, 1, 1], [], []>} : vector<2x4xbf16>, vector<4x16xbf16>, vector<2x16xf32> -> vector<2x16xf32>
    %32 = vector.broadcast %3 : vector<2x1xf32> to vector<2x16xf32>
    %33 = arith.addf %31, %32 : vector<2x16xf32>
    %cst_22 = arith.constant 0.000000e+00 : f32
    %34 = vector.broadcast %cst_22 : f32 to vector<2x16xf32>
    %35 = arith.cmpf oge, %33, %34 : vector<2x16xf32>
    %cst_23 = arith.constant 1.000000e-01 : f32
    %36 = vector.broadcast %cst_23 : f32 to vector<2x16xf32>
    %37 = arith.mulf %36, %33 : vector<2x16xf32>
    %38 = arith.select %35, %33, %37 : vector<2x16xi1>, vector<2x16xf32>
    %c1_i32 = arith.constant 1 : i32
    %39 = arith.cmpi eq, %arg1, %c1_i32 : i32
    %cst_24 = arith.constant 0.000000e+00 : f32
    %cst_25 = arith.constant 1.000000e+00 : f32
    %40 = arith.select %39, %cst_24, %cst_25 : f32
    %41 = vector.broadcast %40 : f32 to vector<2x16xf32>
    %42 = arith.mulf %38, %41 : vector<2x16xf32>
    %43 = vector.extract_strided_slice %12 {offsets = [0, 0], sizes = [2, 112], strides = [1, 1]} : vector<2x128xf32> to vector<2x112xf32>
    %44 = tpu.concatenate %27, %43 in 1 : vector<2x16xf32>, vector<2x112xf32> -> vector<2x128xf32>
    %45 = vector.extract_strided_slice %12 {offsets = [0, 16], sizes = [2, 112], strides = [1, 1]} : vector<2x128xf32> to vector<2x112xf32>
    %46 = tpu.concatenate %45, %42 in 1 : vector<2x112xf32>, vector<2x16xf32> -> vector<2x128xf32>
    %47 = tpu.concatenate %44, %12, %46 in 0 : vector<2x128xf32>, vector<2x128xf32>, vector<2x128xf32> -> vector<6x128xf32>
    %48 = tpu.iota {dimensions = array<i32: 1>} : vector<1x128xi32>
    %c16_i32 = arith.constant 16 : i32
    %c0_i32_26 = arith.constant 0 : i32
    %49 = arith.cmpi eq, %c16_i32, %c0_i32_26 : i32
    %c1_i32_27 = arith.constant 1 : i32
    %50 = arith.select %49, %c1_i32_27, %c16_i32 : i32
    %51 = vector.broadcast %50 : i32 to vector<1x128xi32>
    %52 = arith.remsi %48, %51 : vector<1x128xi32>
    %c0_i32_28 = arith.constant 0 : i32
    %53 = vector.broadcast %c0_i32_28 : i32 to vector<1x128xi32>
    %54 = arith.cmpi ne, %52, %53 : vector<1x128xi32>
    %c0_i32_29 = arith.constant 0 : i32
    %55 = vector.broadcast %c0_i32_29 : i32 to vector<1x128xi32>
    %56 = arith.cmpi slt, %52, %55 : vector<1x128xi32>
    %c0_i32_30 = arith.constant 0 : i32
    %57 = arith.cmpi slt, %50, %c0_i32_30 : i32
    %58 = vector.broadcast %57 : i1 to vector<1x128xi1>
    %59 = vector.broadcast %58 : vector<1x128xi1> to vector<1x128xi1>
    %60 = arith.xori %56, %59 : vector<1x128xi1>
    %61 = arith.andi %60, %54 : vector<1x128xi1>
    %62 = vector.broadcast %50 : i32 to vector<1x128xi32>
    %63 = arith.addi %52, %62 : vector<1x128xi32>
    %64 = arith.select %61, %63, %52 : vector<1x128xi1>, vector<1x128xi32>
    %c0_i32_31 = arith.constant 0 : i32
    %65 = vector.broadcast %c0_i32_31 : i32 to vector<1x128xi32>
    %66 = arith.cmpi ne, %64, %65 : vector<1x128xi32>
    %67 = arith.extui %66 : vector<1x128xi1> to vector<1x128xi32>
    %68 = arith.sitofp %67 : vector<1x128xi32> to vector<1x128xf32>
    %c15_i32 = arith.constant 15 : i32
    %69 = vector.broadcast %c15_i32 : i32 to vector<1x128xi32>
    %70 = arith.cmpi ne, %64, %69 : vector<1x128xi32>
    %71 = arith.extui %70 : vector<1x128xi1> to vector<1x128xi32>
    %72 = arith.sitofp %71 : vector<1x128xi32> to vector<1x128xf32>
    %cst_32 = arith.constant 0.000000e+00 : f32
    %73 = vector.broadcast %cst_32 : f32 to vector<6x1xf32>
    %74 = vector.extract_strided_slice %47 {offsets = [0, 0], sizes = [6, 127], strides = [1, 1]} : vector<6x128xf32> to vector<6x127xf32>
    %75 = tpu.concatenate %73, %74 in 1 : vector<6x1xf32>, vector<6x127xf32> -> vector<6x128xf32>
    %76 = vector.broadcast %68 : vector<1x128xf32> to vector<6x128xf32>
    %77 = arith.mulf %75, %76 : vector<6x128xf32>
    %78 = vector.extract_strided_slice %47 {offsets = [0, 1], sizes = [6, 127], strides = [1, 1]} : vector<6x128xf32> to vector<6x127xf32>
    %79 = tpu.concatenate %78, %73 in 1 : vector<6x127xf32>, vector<6x1xf32> -> vector<6x128xf32>
    %80 = vector.broadcast %72 : vector<1x128xf32> to vector<6x128xf32>
    %81 = arith.mulf %79, %80 : vector<6x128xf32>
    %82 = tpu.concatenate %77, %47, %81 in 0 : vector<6x128xf32>, vector<6x128xf32>, vector<6x128xf32> -> vector<18x128xf32>
    %83 = arith.truncf %82 : vector<18x128xf32> to vector<18x128xbf16>
    %c0_33 = arith.constant 0 : index
    %c0_34 = arith.constant 0 : index
    %84 = vector.load %arg7[%c0_33, %c0_34] : memref<4x18xbf16, #tpu.memory_space<vmem>>, vector<4x18xbf16>
    %cst_35 = arith.constant dense<0.000000e+00> : vector<4x128xf32>
    %85 = tpu.matmul %84, %83, %cst_35 {dimension_numbers = #tpu.dot_dimension_numbers<[1], [0], [0], [1], [0, 0, 1, 1], [], []>} : vector<4x18xbf16>, vector<18x128xbf16>, vector<4x128xf32> -> vector<4x128xf32>
    %c0_36 = arith.constant 0 : index
    %c0_37 = arith.constant 0 : index
    %86 = vector.load %arg8[%c0_36, %c0_37] : memref<4x1xf32, #tpu.memory_space<vmem>>, vector<4x1xf32>
    %87 = vector.broadcast %86 : vector<4x1xf32> to vector<4x128xf32>
    %88 = arith.addf %85, %87 : vector<4x128xf32>
    %cst_38 = arith.constant 0.000000e+00 : f32
    %89 = vector.broadcast %cst_38 : f32 to vector<4x128xf32>
    %90 = arith.cmpf oge, %88, %89 : vector<4x128xf32>
    %cst_39 = arith.constant 1.000000e-01 : f32
    %91 = vector.broadcast %cst_39 : f32 to vector<4x128xf32>
    %92 = arith.mulf %91, %88 : vector<4x128xf32>
    %93 = arith.select %90, %88, %92 : vector<4x128xi1>, vector<4x128xf32>
    %94 = arith.addf %93, %1 : vector<4x128xf32>
    %c0_40 = arith.constant 0 : index
    %c0_41 = arith.constant 0 : index
    %c0_42 = arith.constant 0 : index
    %95 = vector.load %arg9[%c0_40, %c0_41, %c0_42] : memref<1x4x128xf32, #tpu.memory_space<vmem>>, vector<1x4x128xf32>
    %96 = vector.shape_cast %95 : vector<1x4x128xf32> to vector<4x128xf32>
    %97 = vector.shape_cast %94 : vector<4x128xf32> to vector<1x4x128xf32>
    tpu.vector_store %arg9[%c0_40, %c0_41, %c0_42], %97 {strides = array<i32>} : memref<1x4x128xf32, #tpu.memory_space<vmem>>, vector<1x4x128xf32>,
    return
  }
  func.func @transform_0(%arg0: i32, %arg1: i32) -> (i32, i32, i32) {
    %c0_i32 = arith.constant 0 : i32
    %c0_i32_0 = arith.constant 0 : i32
    return %arg0, %c0_i32, %arg1 : i32, i32, i32
  }
  func.func @transform_1(%arg0: i32, %arg1: i32) -> (i32, i32, i32, i32) {
    %c0_i32 = arith.constant 0 : i32
    %c0_i32_0 = arith.constant 0 : i32
    %c0_i32_1 = arith.constant 0 : i32
    return %arg0, %arg1, %c0_i32, %c0_i32_0 : i32, i32, i32, i32
  }
  func.func @transform_2(%arg0: i32, %arg1: i32) -> (i32, i32, i32, i32) {
    %c0_i32 = arith.constant 0 : i32
    %c0_i32_0 = arith.constant 0 : i32
    %c0_i32_1 = arith.constant 0 : i32
    return %arg0, %arg1, %c0_i32, %c0_i32_0 : i32, i32, i32, i32
  }
  func.func @transform_3(%arg0: i32, %arg1: i32) -> (i32, i32) {
    %c0_i32 = arith.constant 0 : i32
    %c0_i32_0 = arith.constant 0 : i32
    %c0_i32_1 = arith.constant 0 : i32
    return %c0_i32, %c0_i32_0 : i32, i32
  }
  func.func @transform_4(%arg0: i32, %arg1: i32) -> (i32, i32) {
    %c0_i32 = arith.constant 0 : i32
    %c0_i32_0 = arith.constant 0 : i32
    %c0_i32_1 = arith.constant 0 : i32
    return %c0_i32, %c0_i32_0 : i32, i32
  }
  func.func @transform_5(%arg0: i32, %arg1: i32) -> (i32, i32) {
    %c0_i32 = arith.constant 0 : i32
    %c0_i32_0 = arith.constant 0 : i32
    %c0_i32_1 = arith.constant 0 : i32
    return %c0_i32, %c0_i32_0 : i32, i32
  }
  func.func @transform_6(%arg0: i32, %arg1: i32) -> (i32, i32) {
    %c0_i32 = arith.constant 0 : i32
    %c0_i32_0 = arith.constant 0 : i32
    %c0_i32_1 = arith.constant 0 : i32
    return %c0_i32, %c0_i32_0 : i32, i32
  }
  func.func @transform_7(%arg0: i32, %arg1: i32) -> (i32, i32, i32) {
    %c0_i32 = arith.constant 0 : i32
    %c0_i32_0 = arith.constant 0 : i32
    return %arg0, %c0_i32, %arg1 : i32, i32, i32
  }
}

</mosaic_0001>

<llo_original>
// kernel: tpu_custom_call.1
$region0: #{tpu_custom_call.1}
  #allocation0 [shape = 'u32[]', space=smem, size = 0x4, offset = 0x4, fixed_abs, tag = 'smem constant byte address 0x4 - core index']
  #allocation1 [shape = 'u32[72,128]{1,0:T(1,128)}', space=vmem, size = 0x9000, scoped, tag = 'internal scratch']
  %s0 = inlined_call_operand.hbm [shape: f32[2,4,256], index: 0, kind: input, shape index: {}]
  %s1 = inlined_call_operand.hbm [shape: f32[2,2,4,16], index: 1, kind: input, shape index: {}]
  %s2 = inlined_call_operand.hbm [shape: f32[2,2,4,16], index: 2, kind: input, shape index: {}]
  %s3 = inlined_call_operand.vmem [shape: bf16[2,4], index: 3, kind: input, shape index: {}]
  %s4 = inlined_call_operand.vmem [shape: f32[2,1], index: 4, kind: input, shape index: {}]
  %s5 = inlined_call_operand.vmem [shape: bf16[4,18], index: 5, kind: input, shape index: {}]
  %s6 = inlined_call_operand.vmem [shape: f32[4,1], index: 6, kind: input, shape index: {}]
  %s7 = inlined_call_operand.hbm [shape: f32[2,4,256], index: 7, kind: output, shape index: {}]
  %s8 = sld [smem:[#allocation0]]
  $region73: #{tpu_custom_call.1} parent=0
    _
  %s10 = ssub.s32 1, %s8
  %s11 = scalar_select 0, %s10, %s8
  $region1: #{tpu_custom_call.1} parent=0
    #allocation2 [shape = 'u8[4096]{0}', space=vmem, size = 0x1000, scoped, tag = 'input window, operand 0']
    #allocation3 [shape = 's32[2]{0}', space=sflag, size = 0x8, scoped, tag = 'scoped memory for tpu_custom_call.1']
    #allocation4 [shape = 's32[2]{0}', space=sflag, size = 0x8, scoped, tag = 'scoped memory for tpu_custom_call.1']
    #allocation5 [shape = 'u8[4096]{0}', space=vmem, size = 0x1000, scoped, tag = 'input window, operand 1']
    #allocation6 [shape = 's32[2]{0}', space=sflag, size = 0x8, scoped, tag = 'scoped memory for tpu_custom_call.1']
    #allocation7 [shape = 'u8[4096]{0}', space=vmem, size = 0x1000, scoped, tag = 'input window, operand 2']
    #allocation8 [shape = 'u8[4096]{0}', space=vmem, size = 0x1000, scoped, tag = 'output window, operand 0']
    %12 = vsyncpa [#allocation3], 0
    %s13 = scalar_lea.sflag [#allocation3], 1
    %14 = vsyncpa %s13, 0
    %15 = vsyncpa [#allocation6], 0
    %s16 = scalar_lea.sflag [#allocation6], 1
    %17 = vsyncpa %s16, 0
    %18 = vsyncpa [#allocation4], 0
    %s19 = scalar_lea.sflag [#allocation4], 1
    %20 = vsyncpa %s19, 0
    loop: start=0, step=1, limit=6
    $region2: #{tpu_custom_call.1} parent=1 // loop_pre_header
      _
    $region3: #{tpu_custom_call.1} parent=1 // loop_header
      %s22 = sphi 0, %s26
      %p23 = scmp.ge.s32.totalorder %s22, 6
      %s29 = sphi 0, %s41
      %s30 = sphi 0, %s37
      %s31 = sphi 0, %s29
      %s32 = sphi 0, %s30
      %s33 = sphi 0, %s31
      %s34 = sphi 0, %s32
      %s46 = sphi 0, %s48
      %s49 = sphi 0, %s46
      %s50 = sphi 0, %s49
      %s66 = sphi 0, %s50
      %s74 = sphi 0, %s76
      %s77 = sphi 0, %s74
      %s78 = sphi 0, %s77
      %s94 = sphi 0, %s78
      %s102 = sphi 0, %s104
      %s105 = sphi 0, %s102
      %s106 = sphi 0, %s105
      %s122 = sphi 0, %s106
      %s126 = sphi 0, %s126
      %s128 = sphi 0, %s126
      %s129 = sphi 0, %s128
      %s143 = sphi 0, %s129
      %s147 = sphi 0, %s147
      %s149 = sphi 0, %s147
      %s150 = sphi 0, %s149
      %s164 = sphi 0, %s150
      %s168 = sphi 0, %s168
      %s170 = sphi 0, %s168
      %s171 = sphi 0, %s170
      %s185 = sphi 0, %s171
      %s189 = sphi 0, %s189
      %s191 = sphi 0, %s189
      %s192 = sphi 0, %s191
      %s206 = sphi 0, %s192
      %s214 = sphi 0, %s216
      %s217 = sphi 0, %s214
      %s218 = sphi 0, %s217
      %s234 = sphi 0, %s218
    $region4: #{tpu_custom_call.1} parent=1 // loop_header_branch
      %25 = sbr.rel (%p23) target = $region8
    $region5: #{tpu_custom_call.1} parent=1 // loop_body
      %s27 = ssub.s32 %s22, 1
      %s28 = ssub.s32 %s22, 2
      %s35 = sadd.s32 1, %s30
      %p36 = scmp.ge.s32.totalorder %s35, 2
      %s37 = scalar_select %p36, 0, %s35
      %s38 = sadd.s32 1, %s29
      %s39 = scalar_select %p36, %s38, %s29
      %p40 = scmp.ge.s32.totalorder %s39, 2
      %s41 = scalar_select %p40, 0, %s39
      %s42 = ssub.s32 %s29, %s41
      %s43 = ssub.s32 %s30, %s37
      %s44 = sor.u32 %s42, %s43
      %p45 = scmp.eq.s32.totalorder %s44, 0
      %s47 = sadd.s32 %s46, 1
      %s48 = scalar_select %p45, %s46, %s47
      %p51 = pneg %p45
      %p52 = scmp.eq.s32.totalorder %s22, 3
      %p53 = por %p51, %p52
      %p54 = scmp.ne.s32.totalorder %s46, %s49
      %p55 = scmp.eq.s32.totalorder %s22, 0
      %p56 = por %p54, %p55
      %p57 = scmp.ne.s32.totalorder %s46, %s49
      %p58 = scmp.eq.s32.totalorder %s27, 3
      %p59 = por %p57, %p58
      %p60 = scmp.ne.s32.totalorder %s49, %s50
      %p61 = scmp.eq.s32.totalorder %s27, 0
      %p62 = por %p60, %p61
      %p63 = scmp.ne.s32.totalorder %s49, %s50
      %p64 = scmp.eq.s32.totalorder %s28, 3
      %p65 = por %p63, %p64
      %p67 = scmp.ne.s32.totalorder %s50, %s66
      %p68 = scmp.eq.s32.totalorder %s28, 0
      %p69 = por %p67, %p68
      %s70 = ssub.s32 %s29, %s41
      %s71 = ssub.s32 %s30, %s37
      %s72 = sor.u32 %s70, %s71
      %p73 = scmp.eq.s32.totalorder %s72, 0
      %s75 = sadd.s32 %s74, 1
      %s76 = scalar_select %p73, %s74, %s75
      %p79 = pneg %p73
      %p80 = scmp.eq.s32.totalorder %s22, 3
      %p81 = por %p79, %p80
      %p82 = scmp.ne.s32.totalorder %s74, %s77
      %p83 = scmp.eq.s32.totalorder %s22, 0
      %p84 = por %p82, %p83
      %p85 = scmp.ne.s32.totalorder %s74, %s77
      %p86 = scmp.eq.s32.totalorder %s27, 3
      %p87 = por %p85, %p86
      %p88 = scmp.ne.s32.totalorder %s77, %s78
      %p89 = scmp.eq.s32.totalorder %s27, 0
      %p90 = por %p88, %p89
      %p91 = scmp.ne.s32.totalorder %s77, %s78
      %p92 = scmp.eq.s32.totalorder %s28, 3
      %p93 = por %p91, %p92
      %p95 = scmp.ne.s32.totalorder %s78, %s94
      %p96 = scmp.eq.s32.totalorder %s28, 0
      %p97 = por %p95, %p96
      %s98 = ssub.s32 %s29, %s41
      %s99 = ssub.s32 %s30, %s37
      %s100 = sor.u32 %s98, %s99
      %p101 = scmp.eq.s32.totalorder %s100, 0
      %s103 = sadd.s32 %s102, 1
      %s104 = scalar_select %p101, %s102, %s103
      %p107 = pneg %p101
      %p108 = scmp.eq.s32.totalorder %s22, 3
      %p109 = por %p107, %p108
      %p110 = scmp.ne.s32.totalorder %s102, %s105
      %p111 = scmp.eq.s32.totalorder %s22, 0
      %p112 = por %p110, %p111
      %p113 = scmp.ne.s32.totalorder %s102, %s105
      %p114 = scmp.eq.s32.totalorder %s27, 3
      %p115 = por %p113, %p114
      %p116 = scmp.ne.s32.totalorder %s105, %s106
      %p117 = scmp.eq.s32.totalorder %s27, 0
      %p118 = por %p116, %p117
      %p119 = scmp.ne.s32.totalorder %s105, %s106
      %p120 = scmp.eq.s32.totalorder %s28, 3
      %p121 = por %p119, %p120
      %p123 = scmp.ne.s32.totalorder %s106, %s122
      %p124 = scmp.eq.s32.totalorder %s28, 0
      %p125 = por %p123, %p124
      %s127 = sadd.s32 %s126, 1
      %p130 = scmp.eq.s32.totalorder %s22, 3
      %p131 = scmp.ne.s32.totalorder %s126, %s128
      %p132 = scmp.eq.s32.totalorder %s22, 0
      %p133 = por %p131, %p132
      %p134 = scmp.ne.s32.totalorder %s126, %s128
      %p135 = scmp.eq.s32.totalorder %s27, 3
      %p136 = por %p134, %p135
      %p137 = scmp.ne.s32.totalorder %s128, %s129
      %p138 = scmp.eq.s32.totalorder %s27, 0
      %p139 = por %p137, %p138
      %p140 = scmp.ne.s32.totalorder %s128, %s129
      %p141 = scmp.eq.s32.totalorder %s28, 3
      %p142 = por %p140, %p141
      %p144 = scmp.ne.s32.totalorder %s129, %s143
      %p145 = scmp.eq.s32.totalorder %s28, 0
      %p146 = por %p144, %p145
      %s148 = sadd.s32 %s147, 1
      %p151 = scmp.eq.s32.totalorder %s22, 3
      %p152 = scmp.ne.s32.totalorder %s147, %s149
      %p153 = scmp.eq.s32.totalorder %s22, 0
      %p154 = por %p152, %p153
      %p155 = scmp.ne.s32.totalorder %s147, %s149
      %p156 = scmp.eq.s32.totalorder %s27, 3
      %p157 = por %p155, %p156
      %p158 = scmp.ne.s32.totalorder %s149, %s150
      %p159 = scmp.eq.s32.totalorder %s27, 0
      %p160 = por %p158, %p159
      %p161 = scmp.ne.s32.totalorder %s149, %s150
      %p162 = scmp.eq.s32.totalorder %s28, 3
      %p163 = por %p161, %p162
      %p165 = scmp.ne.s32.totalorder %s150, %s164
      %p166 = scmp.eq.s32.totalorder %s28, 0
      %p167 = por %p165, %p166
      %s169 = sadd.s32 %s168, 1
      %p172 = scmp.eq.s32.totalorder %s22, 3
      %p173 = scmp.ne.s32.totalorder %s168, %s170
      %p174 = scmp.eq.s32.totalorder %s22, 0
      %p175 = por %p173, %p174
      %p176 = scmp.ne.s32.totalorder %s168, %s170
      %p177 = scmp.eq.s32.totalorder %s27, 3
      %p178 = por %p176, %p177
      %p179 = scmp.ne.s32.totalorder %s170, %s171
      %p180 = scmp.eq.s32.totalorder %s27, 0
      %p181 = por %p179, %p180
      %p182 = scmp.ne.s32.totalorder %s170, %s171
      %p183 = scmp.eq.s32.totalorder %s28, 3
      %p184 = por %p182, %p183
      %p186 = scmp.ne.s32.totalorder %s171, %s185
      %p187 = scmp.eq.s32.totalorder %s28, 0
      %p188 = por %p186, %p187
      %s190 = sadd.s32 %s189, 1
      %p193 = scmp.eq.s32.totalorder %s22, 3
      %p194 = scmp.ne.s32.totalorder %s189, %s191
      %p195 = scmp.eq.s32.totalorder %s22, 0
      %p196 = por %p194, %p195
      %p197 = scmp.ne.s32.totalorder %s189, %s191
      %p198 = scmp.eq.s32.totalorder %s27, 3
      %p199 = por %p197, %p198
      %p200 = scmp.ne.s32.totalorder %s191, %s192
      %p201 = scmp.eq.s32.totalorder %s27, 0
      %p202 = por %p200, %p201
      %p203 = scmp.ne.s32.totalorder %s191, %s192
      %p204 = scmp.eq.s32.totalorder %s28, 3
      %p205 = por %p203, %p204
      %p207 = scmp.ne.s32.totalorder %s192, %s206
      %p208 = scmp.eq.s32.totalorder %s28, 0
      %p209 = por %p207, %p208
      %s210 = ssub.s32 %s29, %s41
      %s211 = ssub.s32 %s30, %s37
      %s212 = sor.u32 %s210, %s211
      %p213 = scmp.eq.s32.totalorder %s212, 0
      %s215 = sadd.s32 %s214, 1
      %s216 = scalar_select %p213, %s214, %s215
      %p219 = pneg %p213
      %p220 = scmp.eq.s32.totalorder %s22, 3
      %p221 = por %p219, %p220
      %p222 = scmp.ne.s32.totalorder %s214, %s217
      %p223 = scmp.eq.s32.totalorder %s22, 0
      %p224 = por %p222, %p223
      %p225 = scmp.ne.s32.totalorder %s214, %s217
      %p226 = scmp.eq.s32.totalorder %s27, 3
      %p227 = por %p225, %p226
      %p228 = scmp.ne.s32.totalorder %s217, %s218
      %p229 = scmp.eq.s32.totalorder %s27, 0
      %p230 = por %p228, %p229
      %p231 = scmp.ne.s32.totalorder %s217, %s218
      %p232 = scmp.eq.s32.totalorder %s28, 3
      %p233 = por %p231, %p232
      %p235 = scmp.ne.s32.totalorder %s218, %s234
      %p236 = scmp.eq.s32.totalorder %s28, 0
      %p237 = por %p235, %p236
      %p238 = scmp.le.s32.totalorder 1, %s22
      %p239 = scmp.lt.s32.totalorder %s22, 5
      %p240 = pnand %p238, %p239
      %p241 = pneg %p240
      // Predicated region
      $region9: #{tpu_custom_call.1} parent=5 // pred_check
        _
      $region10: #{tpu_custom_call.1} parent=5 // pred_check_branch
        %243 = sbr.rel (%p240) target = $region12
      $region11: #{tpu_custom_call.1} parent=5 // pred_region
        %s244 = ssub.s32 %s22, 1
        // Predicated region
        $region13: #{tpu_custom_call.1} parent=11 // pred_check
          %p245 = pneg %p139
        $region14: #{tpu_custom_call.1} parent=11 // pred_check_branch
          %247 = sbr.rel (%p245) target = $region16
        $region15: #{tpu_custom_call.1} parent=11 // pred_region
          _
        $region16: #{tpu_custom_call.1} parent=11 // pred_fallthru
          _
        // Predicated region
        $region17: #{tpu_custom_call.1} parent=11 // pred_check
          %p248 = pneg %p160
        $region18: #{tpu_custom_call.1} parent=11 // pred_check_branch
          %250 = sbr.rel (%p248) target = $region20
        $region19: #{tpu_custom_call.1} parent=11 // pred_region
          _
        $region20: #{tpu_custom_call.1} parent=11 // pred_fallthru
          _
        // Predicated region
        $region21: #{tpu_custom_call.1} parent=11 // pred_check
          %p251 = pneg %p181
        $region22: #{tpu_custom_call.1} parent=11 // pred_check_branch
          %253 = sbr.rel (%p251) target = $region24
        $region23: #{tpu_custom_call.1} parent=11 // pred_region
          _
        $region24: #{tpu_custom_call.1} parent=11 // pred_fallthru
          _
        // Predicated region
        $region25: #{tpu_custom_call.1} parent=11 // pred_check
          %p254 = pneg %p202
        $region26: #{tpu_custom_call.1} parent=11 // pred_check_branch
          %256 = sbr.rel (%p254) target = $region28
        $region27: #{tpu_custom_call.1} parent=11 // pred_region
          _
        $region28: #{tpu_custom_call.1} parent=11 // pred_fallthru
          _
      $region12: #{tpu_custom_call.1} parent=5 // pred_fallthru
        _
      %p257 = scmp.lt.s32.totalorder %s22, 4
      // Predicated region
      $region29: #{tpu_custom_call.1} parent=5 // pred_check
        %p258 = pneg %p257
      $region30: #{tpu_custom_call.1} parent=5 // pred_check_branch
        %260 = sbr.rel (%p258) target = $region32
      $region31: #{tpu_custom_call.1} parent=5 // pred_region
        // Predicated region
        $region33: #{tpu_custom_call.1} parent=31 // pred_check
          %p261 = pneg %p56
        $region34: #{tpu_custom_call.1} parent=31 // pred_check_branch
          %263 = sbr.rel (%p261) target = $region36
        $region35: #{tpu_custom_call.1} parent=31 // pred_region
          %s264 = sand.u32 %s46, 1
          %s265 = scalar_lea.sflag [#allocation3], %s264
          %s266 = sand.u32 %s46, 1
          %s267 = smul.addr %s266, 4
          %s268 = scalar_lea.vmem [#allocation2], %s267
          %270 = vsyncadd %s265, 0
          %s271 = smul.addr %s29, 2
          %s272 = sadd.s32 %s30, %s271
          %s273 = smul.addr %s272, 4
          %s274 = scalar_lea.hbm %s0, %s273
          %s276 = sshll.u32 %s274, 4
          %s277 = int_to_ptr.hbm [resolvable:$true] %s276
          %s278 = sshll.u32 %s268, 4
          %s279 = int_to_ptr.vmem [resolvable:$true] %s278
          %281 = dma.hbm_to_vmem [thread:$0]  %s277, 64, %s279, %s265
        $region36: #{tpu_custom_call.1} parent=31 // pred_fallthru
          _
        // Predicated region
        $region37: #{tpu_custom_call.1} parent=31 // pred_check
          %p282 = pneg %p84
        $region38: #{tpu_custom_call.1} parent=31 // pred_check_branch
          %284 = sbr.rel (%p282) target = $region40
        $region39: #{tpu_custom_call.1} parent=31 // pred_region
          %s285 = sand.u32 %s22, 1
          %s286 = scalar_lea.sflag [#allocation6], %s285
          %s287 = sand.u32 %s74, 1
          %s288 = smul.addr %s287, 4
          %s289 = scalar_lea.vmem [#allocation5], %s288
          %291 = vsyncadd %s286, 0
          %s292 = smul.addr %s29, 2
          %s293 = sadd.s32 %s30, %s292
          %s294 = smul.addr %s293, 4
          %s295 = scalar_lea.hbm %s1, %s294
          %s297 = sshll.u32 %s295, 4
          %s298 = int_to_ptr.hbm [resolvable:$true] %s297
          %s299 = sshll.u32 %s289, 4
          %s300 = int_to_ptr.vmem [resolvable:$true] %s299
          %302 = dma.hbm_to_vmem [thread:$0]  %s298, 64, %s300, %s286
        $region40: #{tpu_custom_call.1} parent=31 // pred_fallthru
          _
        // Predicated region
        $region41: #{tpu_custom_call.1} parent=31 // pred_check
          %p303 = pneg %p112
        $region42: #{tpu_custom_call.1} parent=31 // pred_check_branch
          %305 = sbr.rel (%p303) target = $region44
        $region43: #{tpu_custom_call.1} parent=31 // pred_region
          %s306 = sand.u32 %s22, 1
          %s307 = scalar_lea.sflag [#allocation6], %s306
          %s308 = sand.u32 %s102, 1
          %s309 = smul.addr %s308, 4
          %s310 = scalar_lea.vmem [#allocation7], %s309
          %312 = vsyncadd %s307, 0
          %s313 = smul.addr %s29, 2
          %s314 = sadd.s32 %s30, %s313
          %s315 = smul.addr %s314, 4
          %s316 = scalar_lea.hbm %s2, %s315
          %s318 = sshll.u32 %s316, 4
          %s319 = int_to_ptr.hbm [resolvable:$true] %s318
          %s320 = sshll.u32 %s310, 4
          %s321 = int_to_ptr.vmem [resolvable:$true] %s320
          %323 = dma.hbm_to_vmem [thread:$0]  %s319, 64, %s321, %s307
        $region44: #{tpu_custom_call.1} parent=31 // pred_fallthru
          _
      $region32: #{tpu_custom_call.1} parent=5 // pred_fallthru
        _
      %p324 = scmp.le.s32.totalorder 1, %s22
      %p325 = scmp.lt.s32.totalorder %s22, 5
      %p326 = pnand %p324, %p325
      %p327 = pneg %p326
      // Predicated region
      $region45: #{tpu_custom_call.1} parent=5 // pred_check
        _
      $region46: #{tpu_custom_call.1} parent=5 // pred_check_branch
        %329 = sbr.rel (%p326) target = $region48
      $region47: #{tpu_custom_call.1} parent=5 // pred_region
        %s330 = ssub.s32 %s22, 1
        %s331 = sand.u32 %s49, 1
        %s332 = scalar_lea.sflag [#allocation3], %s331
        %s333 = sand.u32 %s49, 1
        %s334 = smul.addr %s333, 4
        %s335 = scalar_lea.vmem [#allocation2], %s334
        // Predicated region
        $region49: #{tpu_custom_call.1} parent=47 // pred_check
          %p336 = pneg %p62
        $region50: #{tpu_custom_call.1} parent=47 // pred_check_branch
          %338 = sbr.rel (%p336) target = $region52
        $region51: #{tpu_custom_call.1} parent=47 // pred_region
          %340 = dma.done %s332, 64
        $region52: #{tpu_custom_call.1} parent=47 // pred_fallthru
          _
        %s341 = sand.u32 %s27, 1
        %s342 = scalar_lea.sflag [#allocation6], %s341
        %s343 = sand.u32 %s77, 1
        %s344 = smul.addr %s343, 4
        %s345 = scalar_lea.vmem [#allocation5], %s344
        // Predicated region
        $region53: #{tpu_custom_call.1} parent=47 // pred_check
          %p346 = pneg %p90
        $region54: #{tpu_custom_call.1} parent=47 // pred_check_branch
          %348 = sbr.rel (%p346) target = $region56
        $region55: #{tpu_custom_call.1} parent=47 // pred_region
          %350 = dma.done %s342, 64
        $region56: #{tpu_custom_call.1} parent=47 // pred_fallthru
          _
        %s351 = sand.u32 %s27, 1
        %s352 = scalar_lea.sflag [#allocation6], %s351
        %s353 = sand.u32 %s105, 1
        %s354 = smul.addr %s353, 4
        %s355 = scalar_lea.vmem [#allocation7], %s354
        // Predicated region
        $region57: #{tpu_custom_call.1} parent=47 // pred_check
          %p356 = pneg %p118
        $region58: #{tpu_custom_call.1} parent=47 // pred_check_branch
          %358 = sbr.rel (%p356) target = $region60
        $region59: #{tpu_custom_call.1} parent=47 // pred_region
          %360 = dma.done %s352, 64
        $region60: #{tpu_custom_call.1} parent=47 // pred_fallthru
          _
        %s361 = sand.u32 %s49, 1
        %s362 = scalar_lea.sflag [#allocation3], %s361
        %s363 = sand.u32 %s49, 1
        %s364 = smul.addr %s363, 4
        %s365 = scalar_lea.vmem [#allocation2], %s364
        %p366 = pneg %p62
        %p367 = pneg %p59
        %s368 = sand.u32 %s27, 1
        %s369 = scalar_lea.sflag [#allocation6], %s368
        %s370 = sand.u32 %s77, 1
        %s371 = smul.addr %s370, 4
        %s372 = scalar_lea.vmem [#allocation5], %s371
        %p373 = pneg %p90
        %p374 = pneg %p87
        %s375 = sand.u32 %s27, 1
        %s376 = scalar_lea.sflag [#allocation6], %s375
        %s377 = sand.u32 %s105, 1
        %s378 = smul.addr %s377, 4
        %s379 = scalar_lea.vmem [#allocation7], %s378
        %p380 = pneg %p118
        %p381 = pneg %p115
        %p382 = pneg %p139
        %p383 = pneg %p136
        %p384 = pneg %p160
        %p385 = pneg %p157
        %p386 = pneg %p181
        %p387 = pneg %p178
        %p388 = pneg %p202
        %p389 = pneg %p199
        %p390 = pneg %p230
        %p391 = pneg %p227
        %s392 = sand.u32 %s217, 1
        %s393 = scalar_lea.sflag [#allocation4], %s392
        %s394 = sand.u32 %s217, 1
        %s395 = smul.addr %s394, 4
        %s396 = scalar_lea.vmem [#allocation8], %s395
        %v398 = vld [vmem:[%s335] sm:$0xf]
        %v399 = vld [vmem:[%s3] sm:$0x1]
        %v400 = vld [vmem:[%s4] sm:$0x3]
        %v401 = vpack.c.bf16 %v398, %v398
        %403 = vset.pattern.permute.xlu0 0
        %404 = vperm.xlu0 %403, %v400
        %v405 = vpop.permute.xlu0 %404
        %vm407 = vcmask 31744
        %v409 = vsel %vm407, %v399, 0
        %vm411 = vcmask 1041408
        %v413 = vsel %vm411, %v401, 0
        %415 = vmatpush.bf16.msra.mxu0 0
        %416 = vmatpush.bf16.msra.mxu0 0
        %417 = vmatpush.bf16.msra.mxu0 0
        %418 = vmatpush.bf16.msra.mxu0 0
        %419 = vmatpush.bf16.msra.mxu0 0
        %420 = vmatpush.bf16.msra.mxu0 0
        %421 = vmatpush.bf16.msra.mxu0 0
        %422 = vmatpush.bf16.msra.mxu0 %v413
        %423 = vmatmul.bf16.gmra.mxu0 %v409
        %v424 = vpop.f32.mrf.mxu0
        %v425 = vadd.f32 %v405, %v424
        %v426 = vpop.f32.mrf.mxu0
        %427 = vdwg.mxu0
        %vm428 = vcmp.ge.f32.partialorder %v425, 0.0
        %v429 = vmul.f32 %v425, 0.1
        %v430 = vsel %vm428, %v425, %v429
        %v431 = vld [vmem:[%s345] sm:$0xf]
        %v432 = vpack.c.bf16 %v431, %v431
        %v434 = vsel %vm411, %v432, 0
        %436 = vmatpush.bf16.msra.mxu0 0
        %437 = vmatpush.bf16.msra.mxu0 0
        %438 = vmatpush.bf16.msra.mxu0 0
        %439 = vmatpush.bf16.msra.mxu0 0
        %440 = vmatpush.bf16.msra.mxu0 0
        %441 = vmatpush.bf16.msra.mxu0 0
        %442 = vmatpush.bf16.msra.mxu0 0
        %443 = vmatpush.bf16.msra.mxu0 %v434
        %444 = vmatmul.bf16.gmra.mxu0 %v409
        %v445 = vpop.f32.mrf.mxu0
        %v446 = vadd.f32 %v405, %v445
        %v447 = vpop.f32.mrf.mxu0
        %448 = vdwg.mxu0
        %vm449 = vcmp.ge.f32.partialorder %v446, 0.0
        %v450 = vmul.f32 %v446, 0.1
        %v451 = vsel %vm449, %v446, %v450
        %p452 = scmp.eq.s32.totalorder %s32, 0
        %s453 = scalar_select %p452, 0.0, 1.0
        %v454 = vstv %s453
        %v455 = vmul.f32 %v451, %v454
        %v456 = vld [vmem:[%s355] sm:$0xf]
        %v457 = vpack.c.bf16 %v456, %v456
        %v459 = vsel %vm411, %v457, 0
        %461 = vmatpush.bf16.msra.mxu0 0
        %462 = vmatpush.bf16.msra.mxu0 0
        %463 = vmatpush.bf16.msra.mxu0 0
        %464 = vmatpush.bf16.msra.mxu0 0
        %465 = vmatpush.bf16.msra.mxu0 0
        %466 = vmatpush.bf16.msra.mxu0 0
        %467 = vmatpush.bf16.msra.mxu0 0
        %468 = vmatpush.bf16.msra.mxu0 %v459
        %469 = vmatmul.bf16.gmra.mxu0 %v409
        %v470 = vpop.f32.mrf.mxu0
        %v471 = vadd.f32 %v405, %v470
        %v472 = vpop.f32.mrf.mxu0
        %473 = vdwg.mxu0
        %vm474 = vcmp.ge.f32.partialorder %v471, 0.0
        %v475 = vmul.f32 %v471, 0.1
        %v476 = vsel %vm474, %v471, %v475
        %p477 = scmp.eq.s32.totalorder %s32, 1
        %s478 = scalar_select %p477, 0.0, 1.0
        %v479 = vstv %s478
        %v480 = vmul.f32 %v476, %v479
        %482 = vrot.lane.b32.xlu0 %v430, 16
        %v483 = vpop.permute.xlu0 %482
        %vm485 = vcmask 130048
        %v486 = vsel %vm485, %v455, %v483
        %487 = vrot.lane.b32.xlu0 %v430, 112
        %v488 = vpop.permute.xlu0 %487
        %491 = vrot.lane.b32.xlu0 %v480, 112
        %v492 = vpop.permute.xlu0 %491
        %vm494 = vcmask 916480
        %v495 = vsel %vm494, %v488, %v492
        %v496 = vrot.slane %v430, 6
        %v499 = vrot.slane %v495, 4
        %v501 = vsel %vm411, %v486, %v496
        %vm502 = vcmask 1043456
        %v503 = vsel %vm502, %v501, %v499
        %v504 = vlaneseq
        %v505 = vand.u32 %v504, 127
        %vm506 = vcmp.lt.s32.totalorder %v505, 0
        %v507 = vsub.s32 0, %v505
        %v508 = vsel %vm506, %v507, %v505
        %v509 = vshrl.u32 %v508, 4
        %v510 = vand.u32 %v508, 15
        %v511 = vsub.s32 0, %v510
        %v512 = vsel %vm506, %v511, %v510
        %vm513 = vcmp.ne.s32.totalorder %v512, 0
        %vm514 = vcmp.lt.s32.totalorder %v512, 0
        %vm515 = vmand %vm514, %vm513
        %v516 = vadd.s32 %v512, 16
        %v517 = vsel %vm515, %v516, %v512
        %vm518 = vcmp.ne.s32.totalorder %v517, 0
        %v519 = vsel %vm518, 1, 0
        %v520 = vcvt.s32.f32 %v519
        %vm521 = vcmp.ne.s32.totalorder %v517, 15
        %v522 = vsel %vm521, 1, 0
        %v523 = vcvt.s32.f32 %v522
        %525 = vrot.lane.b32.xlu0 %v503, 1
        %v526 = vpop.permute.xlu0 %525
        %vm528 = vcmask 7168
        %v529 = vsel %vm528, 0.0, %v526
        %v530 = vmul.f32 %v529, %v520
        %531 = vrot.lane.b32.xlu0 %v503, 127
        %v532 = vpop.permute.xlu0 %531
        %vm534 = vcmask 1039360
        %v535 = vsel %vm534, %v532, 0.0
        %v536 = vmul.f32 %v535, %v523
        %v537 = vrot.slane %v503, 2
        %v540 = vrot.slane %v536, 4
        %vm542 = vcmask 1045504
        %v543 = vsel %vm542, %v530, %v537
        %v544 = vsel %vm502, %v537, %v540
        %v545 = vpack.c.bf16 %v544, %v543
        %v546 = vpack.c.bf16 %v540, %v540
        %v547 = vld [vmem:[%s5] sm:$0x3]
        %v548 = vld [vmem:[%s6] sm:$0xf]
        %550 = vset.pattern.permute.xlu0 0
        %551 = vperm.xlu0 %550, %v548
        %v552 = vpop.permute.xlu0 %551
        %vm554 = vcmask 146432
        %v556 = vsel %vm554, %v547, 0
        %vm558 = vcmask 1040384
        %v560 = vsel %vm558, %v546, 0
        %562 = vmatpush.bf16.msra.mxu0 0
        %563 = vmatpush.bf16.msra.mxu0 0
        %564 = vmatpush.bf16.msra.mxu0 0
        %565 = vmatpush.bf16.msra.mxu0 0
        %566 = vmatpush.bf16.msra.mxu0 0
        %567 = vmatpush.bf16.msra.mxu0 0
        %568 = vmatpush.bf16.msra.mxu0 %v560
        %569 = vmatpush.bf16.msra.mxu0 %v545
        %570 = vmatmul.bf16.gmra.mxu0 %v556
        %v571 = vpop.f32.mrf.mxu0
        %v572 = vadd.f32 %v552, %v571
        %v573 = vpop.f32.mrf.mxu0
        %574 = vdwg.mxu0
        %vm575 = vcmp.ge.f32.partialorder %v572, 0.0
        %v576 = vmul.f32 %v572, 0.1
        %v577 = vsel %vm575, %v572, %v576
        %v578 = vadd.f32 %v577, %v398
        %579 = vst [vmem:[%s396] sm:$0xf] %v578
        %s580 = sand.u32 %s217, 1
        %s581 = scalar_lea.sflag [#allocation4], %s580
        %s582 = sand.u32 %s217, 1
        %s583 = smul.addr %s582, 4
        %s584 = scalar_lea.vmem [#allocation8], %s583
        // Predicated region
        $region61: #{tpu_custom_call.1} parent=47 // pred_check
          %p585 = pneg %p227
        $region62: #{tpu_custom_call.1} parent=47 // pred_check_branch
          %587 = sbr.rel (%p585) target = $region64
        $region63: #{tpu_custom_call.1} parent=47 // pred_region
          %589 = vsyncadd %s581, 0
          %s590 = smul.addr %s31, 2
          %s591 = sadd.s32 %s32, %s590
          %s592 = smul.addr %s591, 4
          %s593 = scalar_lea.hbm %s7, %s592
          %s595 = sshll.u32 %s584, 4
          %s596 = int_to_ptr.vmem [resolvable:$true] %s595
          %s597 = sshll.u32 %s593, 4
          %s598 = int_to_ptr.hbm [resolvable:$true] %s597
          %600 = dma.vmem_to_hbm [thread:$0]  %s596, 64, %s598, %s581
        $region64: #{tpu_custom_call.1} parent=47 // pred_fallthru
          _
      $region48: #{tpu_custom_call.1} parent=5 // pred_fallthru
        _
      %p601 = scmp.le.s32.totalorder 2, %s22
      // Predicated region
      $region65: #{tpu_custom_call.1} parent=5 // pred_check
        %p602 = pneg %p601
      $region66: #{tpu_custom_call.1} parent=5 // pred_check_branch
        %604 = sbr.rel (%p602) target = $region68
      $region67: #{tpu_custom_call.1} parent=5 // pred_region
        %s605 = ssub.s32 %s22, 2
        // Predicated region
        $region69: #{tpu_custom_call.1} parent=67 // pred_check
          %p606 = pneg %p233
        $region70: #{tpu_custom_call.1} parent=67 // pred_check_branch
          %608 = sbr.rel (%p606) target = $region72
        $region71: #{tpu_custom_call.1} parent=67 // pred_region
          %s609 = sand.u32 %s218, 1
          %s610 = scalar_lea.sflag [#allocation4], %s609
          %s611 = sand.u32 %s218, 1
          %s612 = smul.addr %s611, 4
          %s613 = scalar_lea.vmem [#allocation8], %s612
          %615 = dma.done %s610, 64
        $region72: #{tpu_custom_call.1} parent=67 // pred_fallthru
          _
      $region68: #{tpu_custom_call.1} parent=5 // pred_fallthru
        _
    $region6: #{tpu_custom_call.1} parent=1 // loop_footer
      %s26 = sadd.s32 1, %s22
    $region7: #{tpu_custom_call.1} parent=1 // loop_footer_branch
      %21 = sbr.rel target = $region3
    $region8: #{tpu_custom_call.1} parent=1 // loop_exit
      _
    %616 = vsyncpa [#allocation3], 1
    %s617 = scalar_lea.sflag [#allocation3], 1
    %618 = vsyncpa %s617, 1
    %619 = vsyncpa [#allocation6], 1
    %s620 = scalar_lea.sflag [#allocation6], 1
    %621 = vsyncpa %s620, 1
    %622 = vsyncpa [#allocation4], 1
    %s623 = scalar_lea.sflag [#allocation4], 1
    %624 = vsyncpa %s623, 1

</llo_original>
